<compile_context>
chip_gen: v6e
topology: v6e:2x2x1
jax: 0.10.0
libtpu: 0.0.40
codegen_flags: <defaults>
</compile_context>

<pallas_src>
import math

import jax
import jax.numpy as jnp
import numpy as np
from jax.experimental import pallas as pl
from jax.experimental.pallas import tpu as pltpu

# Combined per-block budget (input tile + output tile, counted with (8,128)
# VMEM layout padding).  Double-buffered this is ~2x, i.e. ~16 MiB, which fits
# the scoped-VMEM limit requested below on v5e / v6e / v7x.
_BLOCK_BUDGET_BYTES = 8 * 1024 * 1024
_VMEM_LIMIT_BYTES = 32 * 1024 * 1024


def _transpose_kernel(x_ref, o_ref):
    # (ta, tb) -> (tb, ta), or batched (tg, ta, tb) -> (tg, tb, ta).
    o_ref[...] = jnp.swapaxes(x_ref[...], -1, -2)


def _ceil_to(v, m):
    return -(-v // m) * m


def _floor_to(v, m):
    return (v // m) * m


def _padded(sub, lane):
    """Element footprint of a (sub, lane) tile in (8, 128)-tiled VMEM layout."""
    return _ceil_to(max(sub, 1), 8) * _ceil_to(max(lane, 1), 128)


def _minor_tile(dim, cap, align=128):
    """Tile for a minor dim: the full dim if it fits `cap`, else the largest
    `align`-multiple <= cap, preferring exact divisors of `dim` (no ragged
    edge).  If no divisor exists the grid simply uses pl.cdiv."""
    if dim <= cap:
        return dim
    t = max(align, _floor_to(cap, align))
    d = t
    while d >= align:
        if dim % d == 0:
            return d
        d -= align
    return t


def _merge_axes(shape, perm):
    """Drop size-1 axes and merge runs of axes that remain adjacent and
    in-order under `perm`.  Returns (merged_shape, merged_perm) such that
    reshape -> transpose(merged_perm) -> reshape reproduces transpose(perm)."""
    n = len(shape)
    kept = [a for a in range(n) if shape[a] != 1]
    if not kept:
        return (), ()
    pos = {a: i for i, a in enumerate(kept)}
    out_order = [a for a in perm if shape[a] != 1]
    groups = []  # in output order; each group is a contiguous run of input axes
    for a in out_order:
        if groups and pos[a] == pos[groups[-1][-1]] + 1:
            groups[-1].append(a)
        else:
            groups.append([a])
    groups_in = sorted(groups, key=lambda g: pos[g[0]])  # in input order
    mshape = tuple(math.prod(shape[a] for a in g) for g in groups_in)
    idx = {id(g): i for i, g in enumerate(groups_in)}
    mperm = tuple(idx[id(g)] for g in groups)
    return mshape, mperm


def _is_tail_swap(perm):
    m = len(perm)
    return m >= 2 and perm[-2] == m - 1 and perm[-1] == m - 2


def _tail_swap_pallas(x, perm):
    """Permutation whose last two output axes are the swapped last two input
    axes; leading axes shuffled arbitrarily.  The leading shuffle is handled
    purely by index maps; the kernel transposes one minor tile, optionally
    batched over a folded leading axis."""
    m = x.ndim
    assert _is_tail_swap(perm)
    L = m - 2
    lead_perm = perm[:L]            # output leading position j <- input axis
    out_pos = [0] * L               # input leading axis i -> output position
    for j, i in enumerate(lead_perm):
        out_pos[i] = j

    A, B = x.shape[-2], x.shape[-1]
    itemsize = np.dtype(x.dtype).itemsize
    budget = max(_BLOCK_BUDGET_BYTES // itemsize, 2 * 8 * 128)

    def cost(tg, ta, tb):           # in-tile + out-tile VMEM elements
        return tg * (_padded(ta, tb) + _padded(tb, ta))

    fold_axis, tg = None, 1
    if cost(1, A, B) <= budget:
        # Whole minor plane fits: take it in full and fold a leading axis so
        # every grid step still moves a large slab (the comamba NCHW<->NHWC
        # small-channel case lands here).
        ta, tb = A, B
        room = budget // cost(1, A, B)
        if L > 0 and room > 1:
            # Prefer the axis that absorbs the most room; tie-break on the
            # input-adjacent axis (contiguous HBM reads).
            cands = sorted(range(L),
                           key=lambda i: (-min(x.shape[i], room), i != L - 1))
            fold_axis = cands[0]
            tg = min(x.shape[fold_axis], room)
    elif 128 * (_ceil_to(B, 128) + _ceil_to(B, 8)) <= budget:
        # Take B in full -> fully contiguous HBM reads per block; tile A.
        tb = B
        ta = _minor_tile(A, budget // (_ceil_to(B, 128) + _ceil_to(B, 8)))
    elif 128 * (_ceil_to(A, 128) + _ceil_to(A, 8)) <= budget:
        # Take A in full -> fully contiguous HBM writes per block; tile B.
        ta = A
        tb = _minor_tile(B, budget // (_ceil_to(A, 128) + _ceil_to(A, 8)))
    else:
        # Both minor dims huge: square-ish 128-aligned tiles.
        side = max(128, _floor_to(math.isqrt(budget // 2), 128))
        ta = _minor_tile(A, side)
        tb = _minor_tile(B, max(128, (budget // 2) // ta))

    grid_lead = tuple(
        pl.cdiv(x.shape[lead_perm[j]], tg if lead_perm[j] == fold_axis else 1)
        for j in range(L))
    grid = grid_lead + (pl.cdiv(A, ta), pl.cdiv(B, tb))
    out_shape = tuple(x.shape[p] for p in perm)

    in_block = [None] * L + [ta, tb]
    out_block = [None] * L + [tb, ta]
    if fold_axis is not None:
        in_block[fold_axis] = tg
        out_block[out_pos[fold_axis]] = tg

    def in_map(*g):
        lead, ia, ib = g[:L], g[L], g[L + 1]
        return tuple(lead[out_pos[i]] for i in range(L)) + (ia, ib)

    def out_map(*g):
        lead, ia, ib = g[:L], g[L], g[L + 1]
        return tuple(lead) + (ib, ia)

    return pl.pallas_call(
        _transpose_kernel,
        out_shape=jax.ShapeDtypeStruct(out_shape, x.dtype),
        grid=grid,
        in_specs=[pl.BlockSpec(tuple(in_block), in_map)],
        out_specs=pl.BlockSpec(tuple(out_block), out_map),
        compiler_params=pltpu.CompilerParams(
            dimension_semantics=("parallel",) * len(grid),
            vmem_limit_bytes=_VMEM_LIMIT_BYTES),
        cost_estimate=pl.CostEstimate(
            flops=0, transcendentals=0,
            bytes_accessed=2 * x.size * itemsize),
    )(x)


def _two_pass(xm, mperm):
    """Fallback for permutations that cross the minor-two boundary twice:
    pass 1 rotates the axes (split into two contiguous groups and swap them),
    pass 2 finishes with a tail-swap.  Returns None if no rotation works.
    (Inherently 2x the minimum HBM traffic.)"""
    m = xm.ndim
    for k in range(1, m):
        rot = tuple(range(k, m)) + tuple(range(k))
        pos = {a: i for i, a in enumerate(rot)}
        rem = tuple(pos[a] for a in mperm)
        rshape = tuple(xm.shape[a] for a in rot)
        ms2, mp2 = _merge_axes(rshape, rem)
        if not _is_tail_swap(mp2):
            continue
        head = math.prod(xm.shape[:k])
        tail = math.prod(xm.shape[k:])
        y = _tail_swap_pallas(jnp.reshape(xm, (head, tail)), (1, 0))
        y = jnp.reshape(y, rshape)
        y = _tail_swap_pallas(jnp.reshape(y, ms2), mp2)
        return jnp.reshape(y, tuple(rshape[a] for a in rem))
    return None


def permute_pallas(x, perm):
    n = x.ndim
    perm = tuple(int(p) % n for p in perm) if n else tuple(perm)
    if sorted(perm) != list(range(n)):
        raise ValueError(f"invalid permutation {perm} for rank {n}")
    if perm == tuple(range(n)):
        return x
    out_shape = tuple(x.shape[p] for p in perm)
    mshape, mperm = _merge_axes(x.shape, perm)
    if len(mshape) <= 1:
        return jnp.reshape(x, out_shape)  # only size-1 axes moved
    xm = jnp.reshape(x, mshape)
    if _is_tail_swap(mperm):
        ym = _tail_swap_pallas(xm, mperm)
    else:
        ym = _two_pass(xm, mperm)
        if ym is None:
            # TODO(synk): exotic permutations needing >2 minor-boundary
            # crossings after axis merging fall back to XLA's transpose.
            ym = jnp.transpose(xm, mperm)
    return jnp.reshape(ym, out_shape)


class Permute:
    """Mirrors comamba's `Permute(nn.Module)`: forward(x) = x.permute(*args)."""

    def __init__(self, *args):
        self.args = args

    def __call__(self, x):
        return permute_pallas(x, self.args)


if __name__ == "__main__":
    key = jax.random.PRNGKey(0)
    x = jax.random.normal(key, (2, 4, 16, 16), dtype=jnp.float32)

    # NCHW -> NHWC (how comamba uses Permute around LayerNorm).
    perm = (0, 2, 3, 1)
    y = jax.block_until_ready(Permute(*perm)(x))
    ref = np.transpose(np.asarray(x), perm)
    assert y.shape == ref.shape
    np.testing.assert_array_equal(np.asarray(y), ref)

    # NHWC -> NCHW (the inverse permutation on the way out).
    perm2 = (0, 3, 1, 2)
    y2 = jax.block_until_ready(Permute(*perm2)(y))
    np.testing.assert_array_equal(np.asarray(y2), np.asarray(x))

    # (0, 1, 3, 2) in bf16 — exercises the dtype-aware budget + leading fold.
    x3 = jax.random.normal(key, (2, 3, 8, 32), dtype=jnp.bfloat16)
    y3 = jax.block_until_ready(Permute(0, 1, 3, 2)(x3))
    np.testing.assert_array_equal(
        np.asarray(y3).astype(np.float32),
        np.transpose(np.asarray(x3).astype(np.float32), (0, 1, 3, 2)))

    print("KERNEL_OK")
</pallas_src>

<mosaic_0001>
module attributes {stable_mosaic.version = 11 : i64} {
  func.func @_transpose_kernel(%arg0: i32, %arg1: i32, %arg2: i32, %arg3: memref<2x4x256xf32, #tpu.memory_space<vmem>>, %arg4: memref<2x256x4xf32, #tpu.memory_space<vmem>>) attributes {dimension_semantics = [#tpu.dimension_semantics<parallel>, #tpu.dimension_semantics<parallel>, #tpu.dimension_semantics<parallel>], iteration_bounds = array<i64: 1, 1, 1>, scalar_prefetch = 0 : i64, scratch_operands = 0 : i64, tpu.core_type = #tpu.core_type<tc>, window_params = [{transform_indices = @transform_0, window_bounds = array<i64: 2, 4, 256>}, {transform_indices = @transform_1, window_bounds = array<i64: 2, 256, 4>}]} {
    %c0 = arith.constant 0 : index
    %c0_0 = arith.constant 0 : index
    %c0_1 = arith.constant 0 : index
    %0 = vector.load %arg3[%c0, %c0_0, %c0_1] : memref<2x4x256xf32, #tpu.memory_space<vmem>>, vector<2x4x256xf32>
    %1 = tpu.transpose %0, [0, 2, 1] : vector<2x4x256xf32> -> vector<2x256x4xf32>
    %c0_2 = arith.constant 0 : index
    %c0_3 = arith.constant 0 : index
    %c0_4 = arith.constant 0 : index
    %2 = vector.load %arg4[%c0_2, %c0_3, %c0_4] : memref<2x256x4xf32, #tpu.memory_space<vmem>>, vector<2x256x4xf32>
    tpu.vector_store %arg4[%c0_2, %c0_3, %c0_4], %1 {strides = array<i32>} : memref<2x256x4xf32, #tpu.memory_space<vmem>>, vector<2x256x4xf32>,
    return
  }
  func.func @transform_0(%arg0: i32, %arg1: i32, %arg2: i32) -> (i32, i32, i32) {
    %c0_i32 = arith.constant 0 : i32
    return %arg0, %arg1, %arg2 : i32, i32, i32
  }
  func.func @transform_1(%arg0: i32, %arg1: i32, %arg2: i32) -> (i32, i32, i32) {
    %c0_i32 = arith.constant 0 : i32
    return %arg0, %arg2, %arg1 : i32, i32, i32
  }
}

</mosaic_0001>

<llo_original>
// kernel: tpu_custom_call.1
$region0: #{tpu_custom_call.1}
  #allocation0 [shape = 'u32[]', space=smem, size = 0x4, offset = 0x4, fixed_abs, tag = 'smem constant byte address 0x4 - core index']
  #allocation1 [shape = 'u32[144,128]{1,0:T(1,128)}', space=vmem, size = 0x12000, scoped, tag = 'internal scratch']
  %s0 = inlined_call_operand.hbm [shape: f32[2,4,256], index: 0, kind: input, shape index: {}]
  %s1 = inlined_call_operand.vmem [shape: f32[2,256,4], index: 1, kind: output, shape index: {}]
  %s2 = sld [smem:[#allocation0]]
  $region18: #{tpu_custom_call.1} parent=0
    _
  %s4 = ssub.s32 1, %s2
  %s5 = scalar_select 0, %s4, %s2
  $region1: #{tpu_custom_call.1} parent=0
    #allocation2 [shape = 'u8[8192]{0}', space=vmem, size = 0x2000, scoped, tag = 'input window, operand 0, single buffered']
    #allocation3 [shape = 's32[1]{0}', space=sflag, size = 0x4, scoped, tag = 'scoped memory for tpu_custom_call.1']
    %6 = vsyncpa [#allocation3], 0
    // Predicated region
    $region2: #{tpu_custom_call.1} parent=1 // pred_check
      _
    $region3: #{tpu_custom_call.1} parent=1 // pred_check_branch
      %8 = sbr.rel (0) target = $region5
    $region4: #{tpu_custom_call.1} parent=1 // pred_region
      %s10 = ssub.s32 256, 256
      %11 = vsyncadd [#allocation3], %s10
      %s12 = sshll.u32 [#allocation2], 4
      %s13 = int_to_ptr.vmem [resolvable:$true] %s12
      %18 = dma.hbm_to_vmem [thread:$0]  %s0, 256, %s13, [#allocation3], 128, 128, 8
    $region5: #{tpu_custom_call.1} parent=1 // pred_fallthru
      _
    // Predicated region
    $region6: #{tpu_custom_call.1} parent=1 // pred_check
      _
    $region7: #{tpu_custom_call.1} parent=1 // pred_check_branch
      %20 = sbr.rel (0) target = $region9
    $region8: #{tpu_custom_call.1} parent=1 // pred_region
      %21 = dma.done [#allocation3], 256
    $region9: #{tpu_custom_call.1} parent=1 // pred_fallthru
      _
    %v22 = vld [vmem:[#allocation2] sm:$0xff]
    %v23 = vld [vmem:[#allocation2 + $0x8] sm:$0xff]
    %v26 = vcombine.high %v22, %v22
    %v27 = vcombine.high %v23, %v23
    %30 = vxpose.xlu0.b32.start [1/16] %v22, 128
    %31 = vxpose.xlu0.b32.cont [2/16] 0.0, 128
    %32 = vxpose.xlu0.b32.cont [3/16] 0.0, 128
    %33 = vxpose.xlu0.b32.cont [4/16] 0.0, 128
    %34 = vxpose.xlu0.b32.cont [5/16] 0.0, 128
    %35 = vxpose.xlu0.b32.cont [6/16] 0.0, 128
    %36 = vxpose.xlu0.b32.cont [7/16] 0.0, 128
    %37 = vxpose.xlu0.b32.cont [8/16] 0.0, 128
    %38 = vxpose.xlu0.b32.cont [9/16] 0.0, 128
    %39 = vxpose.xlu0.b32.cont [10/16] 0.0, 128
    %40 = vxpose.xlu0.b32.cont [11/16] 0.0, 128
    %41 = vxpose.xlu0.b32.cont [12/16] 0.0, 128
    %42 = vxpose.xlu0.b32.cont [13/16] 0.0, 128
    %43 = vxpose.xlu0.b32.cont [14/16] 0.0, 128
    %44 = vxpose.xlu0.b32.cont [15/16] 0.0, 128
    %45 = vxpose.xlu0.b32.end [16/16] 0.0, 128
    %v46 = vpop.trf.xlu0
    %v47 = vpop.trf.xlu0
    %v48 = vpop.trf.xlu0
    %v49 = vpop.trf.xlu0
    %v50 = vpop.trf.xlu0
    %v51 = vpop.trf.xlu0
    %v52 = vpop.trf.xlu0
    %v53 = vpop.trf.xlu0
    %v54 = vpop.trf.xlu0
    %v55 = vpop.trf.xlu0
    %v56 = vpop.trf.xlu0
    %v57 = vpop.trf.xlu0
    %v58 = vpop.trf.xlu0
    %v59 = vpop.trf.xlu0
    %v60 = vpop.trf.xlu0
    %v61 = vpop.trf.xlu0
    %62 = vxpose.xlu0.b32.start [1/16] %v26, 128
    %63 = vxpose.xlu0.b32.cont [2/16] 0.0, 128
    %64 = vxpose.xlu0.b32.cont [3/16] 0.0, 128
    %65 = vxpose.xlu0.b32.cont [4/16] 0.0, 128
    %66 = vxpose.xlu0.b32.cont [5/16] 0.0, 128
    %67 = vxpose.xlu0.b32.cont [6/16] 0.0, 128
    %68 = vxpose.xlu0.b32.cont [7/16] 0.0, 128
    %69 = vxpose.xlu0.b32.cont [8/16] 0.0, 128
    %70 = vxpose.xlu0.b32.cont [9/16] 0.0, 128
    %71 = vxpose.xlu0.b32.cont [10/16] 0.0, 128
    %72 = vxpose.xlu0.b32.cont [11/16] 0.0, 128
    %73 = vxpose.xlu0.b32.cont [12/16] 0.0, 128
    %74 = vxpose.xlu0.b32.cont [13/16] 0.0, 128
    %75 = vxpose.xlu0.b32.cont [14/16] 0.0, 128
    %76 = vxpose.xlu0.b32.cont [15/16] 0.0, 128
    %77 = vxpose.xlu0.b32.end [16/16] 0.0, 128
    %v78 = vpop.trf.xlu0
    %v79 = vpop.trf.xlu0
    %v80 = vpop.trf.xlu0
    %v81 = vpop.trf.xlu0
    %v82 = vpop.trf.xlu0
    %v83 = vpop.trf.xlu0
    %v84 = vpop.trf.xlu0
    %v85 = vpop.trf.xlu0
    %v86 = vpop.trf.xlu0
    %v87 = vpop.trf.xlu0
    %v88 = vpop.trf.xlu0
    %v89 = vpop.trf.xlu0
    %v90 = vpop.trf.xlu0
    %v91 = vpop.trf.xlu0
    %v92 = vpop.trf.xlu0
    %v93 = vpop.trf.xlu0
    %94 = vxpose.xlu0.b32.start [1/16] %v23, 128
    %95 = vxpose.xlu0.b32.cont [2/16] 0.0, 128
    %96 = vxpose.xlu0.b32.cont [3/16] 0.0, 128
    %97 = vxpose.xlu0.b32.cont [4/16] 0.0, 128
    %98 = vxpose.xlu0.b32.cont [5/16] 0.0, 128
    %99 = vxpose.xlu0.b32.cont [6/16] 0.0, 128
    %100 = vxpose.xlu0.b32.cont [7/16] 0.0, 128
    %101 = vxpose.xlu0.b32.cont [8/16] 0.0, 128
    %102 = vxpose.xlu0.b32.cont [9/16] 0.0, 128
    %103 = vxpose.xlu0.b32.cont [10/16] 0.0, 128
    %104 = vxpose.xlu0.b32.cont [11/16] 0.0, 128
    %105 = vxpose.xlu0.b32.cont [12/16] 0.0, 128
    %106 = vxpose.xlu0.b32.cont [13/16] 0.0, 128
    %107 = vxpose.xlu0.b32.cont [14/16] 0.0, 128
    %108 = vxpose.xlu0.b32.cont [15/16] 0.0, 128
    %109 = vxpose.xlu0.b32.end [16/16] 0.0, 128
    %v110 = vpop.trf.xlu0
    %v111 = vpop.trf.xlu0
    %v112 = vpop.trf.xlu0
    %v113 = vpop.trf.xlu0
    %v114 = vpop.trf.xlu0
    %v115 = vpop.trf.xlu0
    %v116 = vpop.trf.xlu0
    %v117 = vpop.trf.xlu0
    %v118 = vpop.trf.xlu0
    %v119 = vpop.trf.xlu0
    %v120 = vpop.trf.xlu0
    %v121 = vpop.trf.xlu0
    %v122 = vpop.trf.xlu0
    %v123 = vpop.trf.xlu0
    %v124 = vpop.trf.xlu0
    %v125 = vpop.trf.xlu0
    %126 = vxpose.xlu0.b32.start [1/16] %v27, 128
    %127 = vxpose.xlu0.b32.cont [2/16] 0.0, 128
    %128 = vxpose.xlu0.b32.cont [3/16] 0.0, 128
    %129 = vxpose.xlu0.b32.cont [4/16] 0.0, 128
    %130 = vxpose.xlu0.b32.cont [5/16] 0.0, 128
    %131 = vxpose.xlu0.b32.cont [6/16] 0.0, 128
    %132 = vxpose.xlu0.b32.cont [7/16] 0.0, 128
    %133 = vxpose.xlu0.b32.cont [8/16] 0.0, 128
    %134 = vxpose.xlu0.b32.cont [9/16] 0.0, 128
    %135 = vxpose.xlu0.b32.cont [10/16] 0.0, 128
    %136 = vxpose.xlu0.b32.cont [11/16] 0.0, 128
    %137 = vxpose.xlu0.b32.cont [12/16] 0.0, 128
    %138 = vxpose.xlu0.b32.cont [13/16] 0.0, 128
    %139 = vxpose.xlu0.b32.cont [14/16] 0.0, 128
    %140 = vxpose.xlu0.b32.cont [15/16] 0.0, 128
    %141 = vxpose.xlu0.b32.end [16/16] 0.0, 128
    %v142 = vpop.trf.xlu0
    %v143 = vpop.trf.xlu0
    %v144 = vpop.trf.xlu0
    %v145 = vpop.trf.xlu0
    %v146 = vpop.trf.xlu0
    %v147 = vpop.trf.xlu0
    %v148 = vpop.trf.xlu0
    %v149 = vpop.trf.xlu0
    %v150 = vpop.trf.xlu0
    %v151 = vpop.trf.xlu0
    %v152 = vpop.trf.xlu0
    %v153 = vpop.trf.xlu0
    %v154 = vpop.trf.xlu0
    %v155 = vpop.trf.xlu0
    %v156 = vpop.trf.xlu0
    %v157 = vpop.trf.xlu0
    %vm158 = vcmask 31744
    %159 = vst.msk [vmem:[%s1] sm:$0xff] %vm158, %v46
    %160 = vst.msk [vmem:[%s1 + $0x8] sm:$0xff] %vm158, %v47
    %161 = vst.msk [vmem:[%s1 + $0x10] sm:$0xff] %vm158, %v48
    %162 = vst.msk [vmem:[%s1 + $0x18] sm:$0xff] %vm158, %v49
    %163 = vst.msk [vmem:[%s1 + $0x20] sm:$0xff] %vm158, %v50
    %164 = vst.msk [vmem:[%s1 + $0x28] sm:$0xff] %vm158, %v51
    %165 = vst.msk [vmem:[%s1 + $0x30] sm:$0xff] %vm158, %v52
    %166 = vst.msk [vmem:[%s1 + $0x38] sm:$0xff] %vm158, %v53
    %167 = vst.msk [vmem:[%s1 + $0x40] sm:$0xff] %vm158, %v54
    %168 = vst.msk [vmem:[%s1 + $0x48] sm:$0xff] %vm158, %v55
    %169 = vst.msk [vmem:[%s1 + $0x50] sm:$0xff] %vm158, %v56
    %170 = vst.msk [vmem:[%s1 + $0x58] sm:$0xff] %vm158, %v57
    %171 = vst.msk [vmem:[%s1 + $0x60] sm:$0xff] %vm158, %v58
    %172 = vst.msk [vmem:[%s1 + $0x68] sm:$0xff] %vm158, %v59
    %173 = vst.msk [vmem:[%s1 + $0x70] sm:$0xff] %vm158, %v60
    %174 = vst.msk [vmem:[%s1 + $0x78] sm:$0xff] %vm158, %v61
    %175 = vst.msk [vmem:[%s1 + $0x80] sm:$0xff] %vm158, %v78
    %176 = vst.msk [vmem:[%s1 + $0x88] sm:$0xff] %vm158, %v79
    %177 = vst.msk [vmem:[%s1 + $0x90] sm:$0xff] %vm158, %v80
    %178 = vst.msk [vmem:[%s1 + $0x98] sm:$0xff] %vm158, %v81
    %179 = vst.msk [vmem:[%s1 + $0xa0] sm:$0xff] %vm158, %v82
    %180 = vst.msk [vmem:[%s1 + $0xa8] sm:$0xff] %vm158, %v83
    %181 = vst.msk [vmem:[%s1 + $0xb0] sm:$0xff] %vm158, %v84
    %182 = vst.msk [vmem:[%s1 + $0xb8] sm:$0xff] %vm158, %v85
    %183 = vst.msk [vmem:[%s1 + $0xc0] sm:$0xff] %vm158, %v86
    %184 = vst.msk [vmem:[%s1 + $0xc8] sm:$0xff] %vm158, %v87
    %185 = vst.msk [vmem:[%s1 + $0xd0] sm:$0xff] %vm158, %v88
    %186 = vst.msk [vmem:[%s1 + $0xd8] sm:$0xff] %vm158, %v89
    %187 = vst.msk [vmem:[%s1 + $0xe0] sm:$0xff] %vm158, %v90
    %188 = vst.msk [vmem:[%s1 + $0xe8] sm:$0xff] %vm158, %v91
    %189 = vst.msk [vmem:[%s1 + $0xf0] sm:$0xff] %vm158, %v92
    %190 = vst.msk [vmem:[%s1 + $0xf8] sm:$0xff] %vm158, %v93
    %191 = vst.msk [vmem:[%s1 + $0x100] sm:$0xff] %vm158, %v110
    %192 = vst.msk [vmem:[%s1 + $0x108] sm:$0xff] %vm158, %v111
    %193 = vst.msk [vmem:[%s1 + $0x110] sm:$0xff] %vm158, %v112
    %194 = vst.msk [vmem:[%s1 + $0x118] sm:$0xff] %vm158, %v113
    %195 = vst.msk [vmem:[%s1 + $0x120] sm:$0xff] %vm158, %v114
    %196 = vst.msk [vmem:[%s1 + $0x128] sm:$0xff] %vm158, %v115
    %197 = vst.msk [vmem:[%s1 + $0x130] sm:$0xff] %vm158, %v116
    %198 = vst.msk [vmem:[%s1 + $0x138] sm:$0xff] %vm158, %v117
    %199 = vst.msk [vmem:[%s1 + $0x140] sm:$0xff] %vm158, %v118
    %200 = vst.msk [vmem:[%s1 + $0x148] sm:$0xff] %vm158, %v119
    %201 = vst.msk [vmem:[%s1 + $0x150] sm:$0xff] %vm158, %v120
    %202 = vst.msk [vmem:[%s1 + $0x158] sm:$0xff] %vm158, %v121
    %203 = vst.msk [vmem:[%s1 + $0x160] sm:$0xff] %vm158, %v122
    %204 = vst.msk [vmem:[%s1 + $0x168] sm:$0xff] %vm158, %v123
    %205 = vst.msk [vmem:[%s1 + $0x170] sm:$0xff] %vm158, %v124
    %206 = vst.msk [vmem:[%s1 + $0x178] sm:$0xff] %vm158, %v125
    %207 = vst.msk [vmem:[%s1 + $0x180] sm:$0xff] %vm158, %v142
    %208 = vst.msk [vmem:[%s1 + $0x188] sm:$0xff] %vm158, %v143
    %209 = vst.msk [vmem:[%s1 + $0x190] sm:$0xff] %vm158, %v144
    %210 = vst.msk [vmem:[%s1 + $0x198] sm:$0xff] %vm158, %v145
    %211 = vst.msk [vmem:[%s1 + $0x1a0] sm:$0xff] %vm158, %v146
    %212 = vst.msk [vmem:[%s1 + $0x1a8] sm:$0xff] %vm158, %v147
    %213 = vst.msk [vmem:[%s1 + $0x1b0] sm:$0xff] %vm158, %v148
    %214 = vst.msk [vmem:[%s1 + $0x1b8] sm:$0xff] %vm158, %v149
    %215 = vst.msk [vmem:[%s1 + $0x1c0] sm:$0xff] %vm158, %v150
    %216 = vst.msk [vmem:[%s1 + $0x1c8] sm:$0xff] %vm158, %v151
    %217 = vst.msk [vmem:[%s1 + $0x1d0] sm:$0xff] %vm158, %v152
    %218 = vst.msk [vmem:[%s1 + $0x1d8] sm:$0xff] %vm158, %v153
    %219 = vst.msk [vmem:[%s1 + $0x1e0] sm:$0xff] %vm158, %v154
    %220 = vst.msk [vmem:[%s1 + $0x1e8] sm:$0xff] %vm158, %v155
    %221 = vst.msk [vmem:[%s1 + $0x1f0] sm:$0xff] %vm158, %v156
    %222 = vst.msk [vmem:[%s1 + $0x1f8] sm:$0xff] %vm158, %v157
    // Predicated region
    $region10: #{tpu_custom_call.1} parent=1 // pred_check
      _
    $region11: #{tpu_custom_call.1} parent=1 // pred_check_branch
      %224 = sbr.rel (0) target = $region13
    $region12: #{tpu_custom_call.1} parent=1 // pred_region
      _
    $region13: #{tpu_custom_call.1} parent=1 // pred_fallthru
      _
    // Predicated region
    $region14: #{tpu_custom_call.1} parent=1 // pred_check
      _
    $region15: #{tpu_custom_call.1} parent=1 // pred_check_branch
      %226 = sbr.rel (0) target = $region17
    $region16: #{tpu_custom_call.1} parent=1 // pred_region
      _
    $region17: #{tpu_custom_call.1} parent=1 // pred_fallthru
      _
    %227 = vsyncpa [#allocation3], 1

</llo_original>
